<compile_context>
chip_gen: v5e
topology: v5e:2x2
jax: 0.10.0
libtpu: 0.0.40
codegen_flags: <defaults>
</compile_context>

<pallas_src>
import jax
import jax.numpy as jnp
import numpy as np
from jax.experimental import pallas as pl
from jax.experimental.pallas import tpu as pltpu


def _round_up(x, m):
    return (x + m - 1) // m * m


def _vmem_capacity_bytes():
    """Per-core physical VMEM; conservative v7x fallback if query unavailable."""
    try:
        cap = int(pltpu.get_tpu_info().vmem_capacity_bytes)
        if cap > 0:
            return cap
    except Exception:
        pass
    return 64 << 20  # v7x per-TensorCore budget (smallest of the fleet)


def _choose_tiles(B, H, Kp, hidden_itemsize, mark_itemsize, w_itemsize,
                  block_b_max, separate_time, row_align):
    """Pick the batch tile TB and an explicit VMEM limit from the HW budget."""
    vmem_cap = _vmem_capacity_bytes()
    # Per-TensorCore accounting (constant operands are replicated per core).
    resident = (H * H + H * Kp) * w_itemsize + (2 * H + Kp) * 4 + 4
    per_row = (2 * (H * hidden_itemsize + Kp * mark_itemsize
                    + (4 if separate_time else 0))       # double-buffered I/O
               + 2 * (H + Kp) * 4)                       # z / logits f32 temps
    budget = int(0.75 * vmem_cap) - resident - (4 << 20)  # compiler headroom
    tb = (budget // max(per_row, 1)) // row_align * row_align
    tb = max(row_align, tb)
    tb = min(tb, block_b_max, _round_up(B, row_align))
    if B > 8:
        # Keep >= 2 grid steps so the "parallel" axis feeds both v7x TCs.
        tb = min(tb, max(row_align, _round_up(-(-B // 2), row_align)))
    if B % row_align == 0:
        while B % tb:          # prefer a tile dividing B: no hidden pad copy
            tb -= row_align
    needed = resident + tb * per_row + (4 << 20)
    vmem_limit = int(min(vmem_cap, max(32 << 20, needed)))
    return tb, vmem_limit


def _make_kernel(num_event_types, fuse_time):
    K = num_event_types

    def kernel(h_ref, w1_ref, b1_ref, w2_ref, b2_ref, wt_ref, bt_ref, *out_refs):
        h = h_ref[...]                                      # [TB, H]

        # ---- time projection on VPU/XLU (no 1-lane MXU pass) ----
        t = (jnp.sum(h.astype(jnp.float32) * wt_ref[...], axis=-1, keepdims=True)
             + bt_ref[0, 0])                                # [TB, 1] f32

        # ---- mark head: Linear(H->H) + ReLU + Linear(H->Kp) on the MXU ----
        cdt = w1_ref.dtype                                  # f32 or bf16 operands
        z = jnp.dot(h.astype(cdt), w1_ref[...],
                    preferred_element_type=jnp.float32) + b1_ref[...]
        z = jnp.maximum(z, 0.0)
        logits = jnp.dot(z.astype(cdt), w2_ref[...],
                         preferred_element_type=jnp.float32) + b2_ref[...]

        # ---- stable log_softmax (padded cols carry -1e30 bias -> exact) ----
        m = logits - jnp.max(logits, axis=-1, keepdims=True)
        lse = jnp.log(jnp.sum(jnp.exp(m), axis=-1, keepdims=True))
        out = m - lse                                       # [TB, Kp] f32

        if fuse_time:
            # Single lane-dense output: park time in padded column K.
            (mark_ref,) = out_refs
            col = jax.lax.broadcasted_iota(jnp.int32, out.shape, 1)
            out = jnp.where(col == K, t, out)
            mark_ref[...] = out.astype(mark_ref.dtype)
        else:
            time_ref, mark_ref = out_refs
            time_ref[...] = t.astype(time_ref.dtype)
            mark_ref[...] = out.astype(mark_ref.dtype)

    return kernel


def prepare_params(params, *, compute_dtype=jnp.bfloat16):
    """One-time parameter prep (pad / cast / reshape), hoisted off the hot path."""
    H = params["w1"].shape[0]
    K = params["w2"].shape[1]
    fuse_time = (K % 128) != 0            # column K is a free padded lane
    Kp = _round_up(max(K, 1), 128)

    cdt = jnp.dtype(compute_dtype)
    w2p = jnp.zeros((H, Kp), cdt).at[:, :K].set(params["w2"].astype(cdt))
    b2p = jnp.full((1, Kp), -1e30, jnp.float32).at[:, :K].set(
        params["b2"].astype(jnp.float32).reshape(1, K))
    prepped = {
        "w1": params["w1"].astype(cdt),
        "b1": params["b1"].astype(jnp.float32).reshape(1, H),
        "w2p": w2p,
        "b2p": b2p,
        "wt_row": params["wt"].astype(jnp.float32).reshape(1, H),  # f32 time proj
        "bt": params["bt"].astype(jnp.float32).reshape(1, 1),
    }
    meta = dict(H=H, K=K, Kp=Kp, fuse_time=fuse_time, compute_dtype=cdt)
    return prepped, meta


def rmtpp_decoder_forward(hidden_states, prepped, meta, *, block_b=1024,
                          hidden_dtype=jnp.float32, mark_dtype=jnp.float32):
    """hidden_states: [B, H]. Returns (time_output [B,1] f32, mark_output [B,K])."""
    B, H = hidden_states.shape
    assert H == meta["H"]
    K, Kp, fuse_time = meta["K"], meta["Kp"], meta["fuse_time"]
    cdt = meta["compute_dtype"]
    hidden_dtype = jnp.dtype(hidden_dtype)
    mark_dtype = jnp.dtype(mark_dtype)

    # Sublane alignment for the streamed tiles (8 for f32, 16 for bf16, ...).
    row_align = max(8, 32 // min(hidden_dtype.itemsize, mark_dtype.itemsize, 4))

    TB, vmem_limit = _choose_tiles(
        B, H, Kp, hidden_dtype.itemsize, mark_dtype.itemsize, cdt.itemsize,
        block_b, separate_time=not fuse_time, row_align=row_align)
    Bp = _round_up(B, TB)

    h_in = hidden_states.astype(hidden_dtype)
    if Bp != B:  # only pays a pad copy when no tile divides B
        h_in = jnp.zeros((Bp, H), hidden_dtype).at[:B].set(h_in)
    grid = (Bp // TB,)

    # Grid-constant operands: whole-array VMEM residents (single copy, no
    # double buffering); scalar time bias in SMEM.
    vmem_full = pl.BlockSpec(memory_space=pltpu.MemorySpace.VMEM)
    in_specs = [
        pl.BlockSpec((TB, H), lambda i: (i, 0)),            # hidden tile (streamed)
        vmem_full,                                          # w1
        vmem_full,                                          # b1
        vmem_full,                                          # w2 (lane-padded)
        vmem_full,                                          # b2 (padded -> -1e30)
        vmem_full,                                          # wt row (f32)
        pl.BlockSpec(memory_space=pltpu.MemorySpace.SMEM),  # bt scalar
    ]

    cost = pl.CostEstimate(
        flops=2 * Bp * H * (H + Kp) + 6 * Bp * (H + Kp),
        transcendentals=Bp * (Kp + 1),
        bytes_accessed=(Bp * H * hidden_dtype.itemsize
                        + Bp * Kp * mark_dtype.itemsize
                        + (0 if fuse_time else Bp * 4)
                        + cdt.itemsize * (H * H + H * Kp)
                        + 4 * (2 * H + Kp + 1)),
    )

    kernel = _make_kernel(K, fuse_time)
    if fuse_time:
        out_shape = jax.ShapeDtypeStruct((Bp, Kp), mark_dtype)
        out_specs = pl.BlockSpec((TB, Kp), lambda i: (i, 0))
    else:
        out_shape = (jax.ShapeDtypeStruct((Bp, 1), jnp.float32),
                     jax.ShapeDtypeStruct((Bp, Kp), mark_dtype))
        out_specs = (pl.BlockSpec((TB, 1), lambda i: (i, 0)),
                     pl.BlockSpec((TB, Kp), lambda i: (i, 0)))

    out = pl.pallas_call(
        kernel,
        out_shape=out_shape,
        grid=grid,
        in_specs=in_specs,
        out_specs=out_specs,
        compiler_params=pltpu.CompilerParams(
            dimension_semantics=("parallel",),
            vmem_limit_bytes=vmem_limit),
        cost_estimate=cost,
    )(h_in, prepped["w1"], prepped["b1"], prepped["w2p"], prepped["b2p"],
      prepped["wt_row"], prepped["bt"])

    if fuse_time:
        time_out = out[:B, K:K + 1].astype(jnp.float32)
        mark_out = out[:B, :K]
    else:
        time_out = out[0][:B]
        mark_out = out[1][:B, :K]
    return time_out, mark_out


def init_params(key, hidden_dim, num_event_types):
    """Synthetic init mirroring nn.Linear parameter shapes (stored as [in, out])."""
    k1, k2, k3, k4, k5, k6 = jax.random.split(key, 6)
    s = 1.0 / float(np.sqrt(hidden_dim))
    u = lambda k, shape: jax.random.uniform(k, shape, jnp.float32, -s, s)
    return {
        "w1": u(k1, (hidden_dim, hidden_dim)),
        "b1": u(k2, (1, hidden_dim)),
        "w2": u(k3, (hidden_dim, num_event_types)),
        "b2": u(k4, (1, num_event_types)),
        "wt": u(k5, (hidden_dim, 1)),
        "bt": u(k6, (1, 1)),
        # intensity_w / intensity_b only used in compute_loss / get_intensity.
        "intensity_w": jnp.float32(0.1),
        "intensity_b": jnp.float32(0.1),
    }


def reference_forward(hidden_states, p):
    """Ground-truth forward in float64 on host (precision-default independent)."""
    h = np.asarray(hidden_states, np.float64)
    w1 = np.asarray(p["w1"], np.float64); b1 = np.asarray(p["b1"], np.float64)
    w2 = np.asarray(p["w2"], np.float64); b2 = np.asarray(p["b2"], np.float64)
    wt = np.asarray(p["wt"], np.float64); bt = np.asarray(p["bt"], np.float64)
    t = h @ wt + bt
    z = np.maximum(h @ w1 + b1, 0.0)
    logits = z @ w2 + b2
    m = logits - logits.max(-1, keepdims=True)
    logp = m - np.log(np.exp(m).sum(-1, keepdims=True))
    return t, logp


if __name__ == "__main__":
    key = jax.random.PRNGKey(0)
    k_h, k_p, k_p2 = jax.random.split(key, 3)

    batch, hidden_dim, num_event_types = 8, 32, 16
    hidden_states = jax.random.normal(k_h, (batch, hidden_dim), jnp.float32)
    params = init_params(k_p, hidden_dim, num_event_types)
    t_ref, m_ref = reference_forward(hidden_states, params)

    # (1) f32 matmul operands, f32 I/O (fused-time path since K % 128 != 0).
    prep_f32, meta_f32 = prepare_params(params, compute_dtype=jnp.float32)
    t_out, m_out = rmtpp_decoder_forward(hidden_states, prep_f32, meta_f32)
    t_out, m_out = jax.block_until_ready((t_out, m_out))
    assert t_out.shape == (batch, 1) and m_out.shape == (batch, num_event_types)
    assert np.allclose(np.asarray(t_out), t_ref, atol=1e-4, rtol=1e-4)
    assert np.allclose(np.asarray(m_out), m_ref, atol=1e-4, rtol=1e-4)

    # (2) Bandwidth mode: bf16 MXU operands + bf16 hidden/mark HBM streams
    #     (valid on v5e/v6e/v7x; epilogue math stays f32).
    prep_bf, meta_bf = prepare_params(params, compute_dtype=jnp.bfloat16)
    t_bw, m_bw = rmtpp_decoder_forward(hidden_states, prep_bf, meta_bf,
                                       hidden_dtype=jnp.bfloat16,
                                       mark_dtype=jnp.bfloat16)
    t_bw, m_bw = jax.block_until_ready((t_bw, m_bw))
    assert t_bw.shape == (batch, 1) and m_bw.shape == (batch, num_event_types)
    assert np.allclose(np.asarray(t_bw, np.float64), t_ref, atol=1e-1, rtol=1e-1)
    assert np.allclose(np.asarray(m_bw, np.float64), m_ref, atol=1e-1, rtol=1e-1)

    # (3) K % 128 == 0 config: separate (TB,1) time output path.
    K2 = 128
    params2 = init_params(k_p2, hidden_dim, K2)
    t2_ref, m2_ref = reference_forward(hidden_states, params2)
    prep2, meta2 = prepare_params(params2, compute_dtype=jnp.float32)
    t2, m2 = rmtpp_decoder_forward(hidden_states, prep2, meta2)
    t2, m2 = jax.block_until_ready((t2, m2))
    assert t2.shape == (batch, 1) and m2.shape == (batch, K2)
    assert np.allclose(np.asarray(t2), t2_ref, atol=1e-4, rtol=1e-4)
    assert np.allclose(np.asarray(m2), m2_ref, atol=1e-4, rtol=1e-4)

    print("KERNEL_OK")
</pallas_src>

<mosaic_0001>
module attributes {stable_mosaic.version = 11 : i64} {
  func.func @kernel(%arg0: i32, %arg1: memref<8x32xf32, #tpu.memory_space<vmem>>, %arg2: memref<32x32xf32, #tpu.memory_space<vmem>>, %arg3: memref<1x32xf32, #tpu.memory_space<vmem>>, %arg4: memref<32x128xf32, #tpu.memory_space<vmem>>, %arg5: memref<1x128xf32, #tpu.memory_space<vmem>>, %arg6: memref<1x32xf32, #tpu.memory_space<vmem>>, %arg7: memref<1x1xf32, #tpu.memory_space<smem>>, %arg8: memref<8x128xf32, #tpu.memory_space<vmem>>) attributes {dimension_semantics = [#tpu.dimension_semantics<parallel>], iteration_bounds = array<i64: 1>, scalar_prefetch = 0 : i64, scratch_operands = 0 : i64, tpu.core_type = #tpu.core_type<tc>, window_params = [{transform_indices = @transform_0, window_bounds = array<i64: 8, 32>}, {pipeline_mode = #tpu.pipeline_mode<synchronous>, transform_indices = @transform_1, window_bounds = array<i64: 32, 32>}, {pipeline_mode = #tpu.pipeline_mode<synchronous>, transform_indices = @transform_2, window_bounds = array<i64: 1, 32>}, {pipeline_mode = #tpu.pipeline_mode<synchronous>, transform_indices = @transform_3, window_bounds = array<i64: 32, 128>}, {pipeline_mode = #tpu.pipeline_mode<synchronous>, transform_indices = @transform_4, window_bounds = array<i64: 1, 128>}, {pipeline_mode = #tpu.pipeline_mode<synchronous>, transform_indices = @transform_5, window_bounds = array<i64: 1, 32>}, {transform_indices = @transform_6, window_bounds = array<i64: 1, 1>}, {transform_indices = @transform_7, window_bounds = array<i64: 8, 128>}]} {
    %c0 = arith.constant 0 : index
    %c0_0 = arith.constant 0 : index
    %0 = vector.load %arg1[%c0, %c0_0] : memref<8x32xf32, #tpu.memory_space<vmem>>, vector<8x32xf32>
    %c0_1 = arith.constant 0 : index
    %c0_2 = arith.constant 0 : index
    %1 = vector.load %arg6[%c0_1, %c0_2] : memref<1x32xf32, #tpu.memory_space<vmem>>, vector<1x32xf32>
    %2 = vector.broadcast %1 : vector<1x32xf32> to vector<8x32xf32>
    %3 = arith.mulf %0, %2 : vector<8x32xf32>
    %cst = arith.constant dense<0.000000e+00> : vector<8xf32>
    %4 = vector.multi_reduction <add>, %3, %cst [1] : vector<8x32xf32> to vector<8xf32>
    %5 = vector.shape_cast %4 : vector<8xf32> to vector<8x1xf32>
    %c0_3 = arith.constant 0 : index
    %c0_4 = arith.constant 0 : index
    %6 = memref.load %arg7[%c0_3, %c0_4] : memref<1x1xf32, #tpu.memory_space<smem>>
    %7 = vector.broadcast %6 : f32 to vector<8x1xf32>
    %8 = arith.addf %5, %7 : vector<8x1xf32>
    %c0_5 = arith.constant 0 : index
    %c0_6 = arith.constant 0 : index
    %9 = vector.load %arg2[%c0_5, %c0_6] : memref<32x32xf32, #tpu.memory_space<vmem>>, vector<32x32xf32>
    %cst_7 = arith.constant dense<0.000000e+00> : vector<8x32xf32>
    %10 = tpu.matmul %0, %9, %cst_7 {dimension_numbers = #tpu.dot_dimension_numbers<[1], [0], [0], [1], [0, 0, 1, 1], [], []>} : vector<8x32xf32>, vector<32x32xf32>, vector<8x32xf32> -> vector<8x32xf32>
    %c0_8 = arith.constant 0 : index
    %c0_9 = arith.constant 0 : index
    %11 = vector.load %arg3[%c0_8, %c0_9] : memref<1x32xf32, #tpu.memory_space<vmem>>, vector<1x32xf32>
    %12 = vector.broadcast %11 : vector<1x32xf32> to vector<8x32xf32>
    %13 = arith.addf %10, %12 : vector<8x32xf32>
    %cst_10 = arith.constant 0.000000e+00 : f32
    %14 = vector.broadcast %cst_10 : f32 to vector<8x32xf32>
    %15 = arith.maximumf %13, %14 : vector<8x32xf32>
    %c0_11 = arith.constant 0 : index
    %c0_12 = arith.constant 0 : index
    %16 = vector.load %arg4[%c0_11, %c0_12] : memref<32x128xf32, #tpu.memory_space<vmem>>, vector<32x128xf32>
    %cst_13 = arith.constant dense<0.000000e+00> : vector<8x128xf32>
    %17 = tpu.matmul %15, %16, %cst_13 {dimension_numbers = #tpu.dot_dimension_numbers<[1], [0], [0], [1], [0, 0, 1, 1], [], []>} : vector<8x32xf32>, vector<32x128xf32>, vector<8x128xf32> -> vector<8x128xf32>
    %c0_14 = arith.constant 0 : index
    %c0_15 = arith.constant 0 : index
    %18 = vector.load %arg5[%c0_14, %c0_15] : memref<1x128xf32, #tpu.memory_space<vmem>>, vector<1x128xf32>
    %19 = vector.broadcast %18 : vector<1x128xf32> to vector<8x128xf32>
    %20 = arith.addf %17, %19 : vector<8x128xf32>
    %cst_16 = arith.constant dense<0xFF800000> : vector<8xf32>
    %21 = vector.multi_reduction <maximumf>, %20, %cst_16 [1] : vector<8x128xf32> to vector<8xf32>
    %22 = vector.shape_cast %21 : vector<8xf32> to vector<8x1xf32>
    %23 = vector.broadcast %22 : vector<8x1xf32> to vector<8x128xf32>
    %24 = arith.subf %20, %23 : vector<8x128xf32>
    %25 = math.exp %24 : vector<8x128xf32>
    %cst_17 = arith.constant dense<0.000000e+00> : vector<8xf32>
    %26 = vector.multi_reduction <add>, %25, %cst_17 [1] : vector<8x128xf32> to vector<8xf32>
    %27 = vector.shape_cast %26 : vector<8xf32> to vector<8x1xf32>
    %28 = math.log %27 : vector<8x1xf32>
    %29 = vector.broadcast %28 : vector<8x1xf32> to vector<8x128xf32>
    %30 = arith.subf %24, %29 : vector<8x128xf32>
    %31 = tpu.iota {dimensions = array<i32: 1>} : vector<8x128xi32>
    %c16_i32 = arith.constant 16 : i32
    %32 = vector.broadcast %c16_i32 : i32 to vector<8x128xi32>
    %33 = arith.cmpi eq, %31, %32 : vector<8x128xi32>
    %34 = vector.shape_cast %8 : vector<8x1xf32> to vector<8x1xf32>
    %35 = vector.broadcast %34 : vector<8x1xf32> to vector<8x128xf32>
    %36 = arith.select %33, %35, %30 : vector<8x128xi1>, vector<8x128xf32>
    %c0_18 = arith.constant 0 : index
    %c0_19 = arith.constant 0 : index
    %37 = vector.load %arg8[%c0_18, %c0_19] : memref<8x128xf32, #tpu.memory_space<vmem>>, vector<8x128xf32>
    tpu.vector_store %arg8[%c0_18, %c0_19], %36 {strides = array<i32>} : memref<8x128xf32, #tpu.memory_space<vmem>>, vector<8x128xf32>,
    return
  }
  func.func @transform_0(%arg0: i32) -> (i32, i32) {
    %c0_i32 = arith.constant 0 : i32
    %c0_i32_0 = arith.constant 0 : i32
    return %arg0, %c0_i32 : i32, i32
  }
  func.func @transform_1(%arg0: i32) -> (i32, i32) {
    %c0_i32 = arith.constant 0 : i32
    %c0_i32_0 = arith.constant 0 : i32
    %c0_i32_1 = arith.constant 0 : i32
    return %c0_i32, %c0_i32_0 : i32, i32
  }
  func.func @transform_2(%arg0: i32) -> (i32, i32) {
    %c0_i32 = arith.constant 0 : i32
    %c0_i32_0 = arith.constant 0 : i32
    %c0_i32_1 = arith.constant 0 : i32
    return %c0_i32, %c0_i32_0 : i32, i32
  }
  func.func @transform_3(%arg0: i32) -> (i32, i32) {
    %c0_i32 = arith.constant 0 : i32
    %c0_i32_0 = arith.constant 0 : i32
    %c0_i32_1 = arith.constant 0 : i32
    return %c0_i32, %c0_i32_0 : i32, i32
  }
  func.func @transform_4(%arg0: i32) -> (i32, i32) {
    %c0_i32 = arith.constant 0 : i32
    %c0_i32_0 = arith.constant 0 : i32
    %c0_i32_1 = arith.constant 0 : i32
    return %c0_i32, %c0_i32_0 : i32, i32
  }
  func.func @transform_5(%arg0: i32) -> (i32, i32) {
    %c0_i32 = arith.constant 0 : i32
    %c0_i32_0 = arith.constant 0 : i32
    %c0_i32_1 = arith.constant 0 : i32
    return %c0_i32, %c0_i32_0 : i32, i32
  }
  func.func @transform_6(%arg0: i32) -> (i32, i32) {
    %c0_i32 = arith.constant 0 : i32
    %c0_i32_0 = arith.constant 0 : i32
    %c0_i32_1 = arith.constant 0 : i32
    return %c0_i32, %c0_i32_0 : i32, i32
  }
  func.func @transform_7(%arg0: i32) -> (i32, i32) {
    %c0_i32 = arith.constant 0 : i32
    %c0_i32_0 = arith.constant 0 : i32
    return %arg0, %c0_i32 : i32, i32
  }
}

</mosaic_0001>

<llo_original>
// kernel: tpu_custom_call.1
$region0: #{tpu_custom_call.1}
  #allocation0 [shape = 'u32[]', space=smem, size = 0x4, offset = 0x4, fixed_abs, tag = 'smem constant byte address 0x4 - core index']
  #allocation1 [shape = 'u32[72,128]{1,0:T(1,128)}', space=vmem, size = 0x9000, scoped, tag = 'internal scratch']
  #allocation2 [shape = 'f32[1,1]{1,0:T(1,128)S(6)}', space=smem, size = 0x200, scoped, tag = 'scoped memory for tpu_custom_call.1']
  %s0 = inlined_call_operand.hbm [shape: f32[8,32], index: 0, kind: input, shape index: {}]
  %s1 = inlined_call_operand.hbm [shape: f32[32,32], index: 1, kind: input, shape index: {}]
  %s2 = inlined_call_operand.vmem [shape: f32[1,32], index: 2, kind: input, shape index: {}]
  %s3 = inlined_call_operand.hbm [shape: f32[32,128], index: 3, kind: input, shape index: {}]
  %s4 = inlined_call_operand.vmem [shape: f32[1,128], index: 4, kind: input, shape index: {}]
  %s5 = inlined_call_operand.vmem [shape: f32[1,32], index: 5, kind: input, shape index: {}]
  %s6 = inlined_call_operand.<no memory space> [shape: f32[1,1], index: 6, kind: input, shape index: {}]
  %s7 = inlined_call_operand.hbm [shape: f32[8,128], index: 7, kind: output, shape index: {}]
  %s8 = sld [smem:[#allocation0]]
  $region50: #{tpu_custom_call.1} parent=0
    _
  %s10 = ssub.s32 1, %s8
  %s11 = scalar_select 0, %s10, %s8
  %12 = sst [smem:[#allocation2]] %s6
  $region1: #{tpu_custom_call.1} parent=0
    #allocation3 [shape = 'u8[4096]{0}', space=vmem, size = 0x1000, scoped, tag = 'input window, operand 0, single buffered']
    #allocation4 [shape = 's32[1]{0}', space=sflag, size = 0x4, scoped, tag = 'scoped memory for tpu_custom_call.1']
    #allocation5 [shape = 's32[1]{0}', space=sflag, size = 0x4, scoped, tag = 'scoped memory for tpu_custom_call.1']
    #allocation6 [shape = 'u8[16384]{0}', space=vmem, size = 0x4000, scoped, tag = 'input window, operand 1, single buffered']
    #allocation7 [shape = 's32[1]{0}', space=sflag, size = 0x4, scoped, tag = 'scoped memory for tpu_custom_call.1']
    #allocation8 [shape = 'u8[16384]{0}', space=vmem, size = 0x4000, scoped, tag = 'input window, operand 3, single buffered']
    #allocation9 [shape = 'u8[4096]{0}', space=vmem, size = 0x1000, scoped, tag = 'output window, operand 0, single buffered']
    %13 = vsyncpa [#allocation4], 0
    %14 = vsyncpa [#allocation7], 0
    %15 = vsyncpa [#allocation5], 0
    // Predicated region
    $region2: #{tpu_custom_call.1} parent=1 // pred_check
      _
    $region3: #{tpu_custom_call.1} parent=1 // pred_check_branch
      %17 = sbr.rel (0) target = $region5
    $region4: #{tpu_custom_call.1} parent=1 // pred_region
      %19 = vsyncadd [#allocation4], 0
      %s21 = sshll.u32 %s0, 4
      %s22 = int_to_ptr.hbm [resolvable:$true] %s21
      %s23 = sshll.u32 [#allocation3], 4
      %s24 = int_to_ptr.vmem [resolvable:$true] %s23
      %26 = dma.hbm_to_vmem [thread:$0]  %s22, 128, %s24, [#allocation4]
    $region5: #{tpu_custom_call.1} parent=1 // pred_fallthru
      _
    // Predicated region
    $region6: #{tpu_custom_call.1} parent=1 // pred_check
      _
    $region7: #{tpu_custom_call.1} parent=1 // pred_check_branch
      %28 = sbr.rel (0) target = $region9
    $region8: #{tpu_custom_call.1} parent=1 // pred_region
      %30 = vsyncadd [#allocation7], 0
      %s31 = sshll.u32 %s1, 4
      %s32 = int_to_ptr.hbm [resolvable:$true] %s31
      %s33 = sshll.u32 [#allocation6], 4
      %s34 = int_to_ptr.vmem [resolvable:$true] %s33
      %39 = dma.hbm_to_vmem [thread:$0]  %s32, 512, %s34, [#allocation7], 128, 128, 8
    $region9: #{tpu_custom_call.1} parent=1 // pred_fallthru
      _
    // Predicated region
    $region10: #{tpu_custom_call.1} parent=1 // pred_check
      _
    $region11: #{tpu_custom_call.1} parent=1 // pred_check_branch
      %41 = sbr.rel (0) target = $region13
    $region12: #{tpu_custom_call.1} parent=1 // pred_region
      _
    $region13: #{tpu_custom_call.1} parent=1 // pred_fallthru
      _
    // Predicated region
    $region14: #{tpu_custom_call.1} parent=1 // pred_check
      _
    $region15: #{tpu_custom_call.1} parent=1 // pred_check_branch
      %43 = sbr.rel (0) target = $region17
    $region16: #{tpu_custom_call.1} parent=1 // pred_region
      %45 = vsyncadd [#allocation7], 0
      %s46 = sshll.u32 %s3, 4
      %s47 = int_to_ptr.hbm [resolvable:$true] %s46
      %s48 = sshll.u32 [#allocation8], 4
      %s49 = int_to_ptr.vmem [resolvable:$true] %s48
      %54 = dma.hbm_to_vmem [thread:$0]  %s47, 512, %s49, [#allocation7], 128, 128, 8
    $region17: #{tpu_custom_call.1} parent=1 // pred_fallthru
      _
    // Predicated region
    $region18: #{tpu_custom_call.1} parent=1 // pred_check
      _
    $region19: #{tpu_custom_call.1} parent=1 // pred_check_branch
      %56 = sbr.rel (0) target = $region21
    $region20: #{tpu_custom_call.1} parent=1 // pred_region
      _
    $region21: #{tpu_custom_call.1} parent=1 // pred_fallthru
      _
    // Predicated region
    $region22: #{tpu_custom_call.1} parent=1 // pred_check
      _
    $region23: #{tpu_custom_call.1} parent=1 // pred_check_branch
      %58 = sbr.rel (0) target = $region25
    $region24: #{tpu_custom_call.1} parent=1 // pred_region
      _
    $region25: #{tpu_custom_call.1} parent=1 // pred_fallthru
      _
    // Predicated region
    $region26: #{tpu_custom_call.1} parent=1 // pred_check
      _
    $region27: #{tpu_custom_call.1} parent=1 // pred_check_branch
      %60 = sbr.rel (0) target = $region29
    $region28: #{tpu_custom_call.1} parent=1 // pred_region
      _
    $region29: #{tpu_custom_call.1} parent=1 // pred_fallthru
      _
    // Predicated region
    $region30: #{tpu_custom_call.1} parent=1 // pred_check
      _
    $region31: #{tpu_custom_call.1} parent=1 // pred_check_branch
      %62 = sbr.rel (0) target = $region33
    $region32: #{tpu_custom_call.1} parent=1 // pred_region
      %64 = dma.done [#allocation4], 128
    $region33: #{tpu_custom_call.1} parent=1 // pred_fallthru
      _
    // Predicated region
    $region34: #{tpu_custom_call.1} parent=1 // pred_check
      _
    $region35: #{tpu_custom_call.1} parent=1 // pred_check_branch
      %66 = sbr.rel (0) target = $region37
    $region36: #{tpu_custom_call.1} parent=1 // pred_region
      %68 = dma.done [#allocation7], 512
    $region37: #{tpu_custom_call.1} parent=1 // pred_fallthru
      _
    // Predicated region
    $region38: #{tpu_custom_call.1} parent=1 // pred_check
      _
    $region39: #{tpu_custom_call.1} parent=1 // pred_check_branch
      %70 = sbr.rel (0) target = $region41
    $region40: #{tpu_custom_call.1} parent=1 // pred_region
      %72 = dma.done [#allocation7], 512
    $region41: #{tpu_custom_call.1} parent=1 // pred_fallthru
      _
    %v73 = vld [vmem:[#allocation3] sm:$0xff]
    %v74 = vld [vmem:[%s5] sm:$0x1]
    %v76 = vperm.slane %v74, 0
    %v78 = vmul.f32 %v73, %v76
    %vm79 = vcmask 261120
    %v80 = vsel %vm79, %v78, 0.0
    %81 = vadd.xlane.f32.xlu0 %v80
    %v82 = vpop.xlane.xlu0 %81
    %s83 = sld [smem:[#allocation2]]
    %v84 = vstv %s83
    %v85 = vadd.f32 %v82, %v84
    %v86 = vld [vmem:[#allocation6] sm:$0xff]
    %v87 = vld [vmem:[#allocation6 + $0x8] sm:$0xff]
    %v88 = vld [vmem:[#allocation6 + $0x10] sm:$0xff]
    %v89 = vld [vmem:[#allocation6 + $0x18] sm:$0xff]
    %v90 = vld [vmem:[%s2] sm:$0x1]
    %v92 = vperm.slane %v90, 0
    %v95 = vsel %vm79, %v73, 0
    %97 = vmatpush.msra.mxu0 0.0
    %98 = vmatpush.msra.mxu0 0.0
    %99 = vmatpush.msra.mxu0 0.0
    %100 = vmatpush.msra.mxu0 0.0
    %101 = vmatpush.msra.mxu0 0.0
    %102 = vmatpush.msra.mxu0 0.0
    %103 = vmatpush.msra.mxu0 0.0
    %104 = vmatpush.msra.mxu0 0.0
    %105 = vmatpush.msra.mxu0 0.0
    %106 = vmatpush.msra.mxu0 0.0
    %107 = vmatpush.msra.mxu0 0.0
    %108 = vmatpush.msra.mxu0 0.0
    %109 = vmatpush.msra.mxu0 %v89
    %110 = vmatpush.msra.mxu0 %v88
    %111 = vmatpush.msra.mxu0 %v87
    %112 = vmatpush.msra.mxu0 %v86
    %113 = vmatmul.f32.gmra.mxu0 %v95
    %v114 = vpop.f32.mrf.mxu0
    %v115 = vadd.f32 %v92, %v114
    %116 = vdwg.mxu0
    %v117 = vmax.f32 %v115, 0.0
    %v118 = vld [vmem:[#allocation8] sm:$0xff]
    %v119 = vld [vmem:[#allocation8 + $0x8] sm:$0xff]
    %v120 = vld [vmem:[#allocation8 + $0x10] sm:$0xff]
    %v121 = vld [vmem:[#allocation8 + $0x18] sm:$0xff]
    %v122 = vld [vmem:[%s4] sm:$0x1]
    %v124 = vperm.slane %v122, 0
    %v127 = vsel %vm79, %v117, 0
    %129 = vmatpush.msra.mxu0 0.0
    %130 = vmatpush.msra.mxu0 0.0
    %131 = vmatpush.msra.mxu0 0.0
    %132 = vmatpush.msra.mxu0 0.0
    %133 = vmatpush.msra.mxu0 0.0
    %134 = vmatpush.msra.mxu0 0.0
    %135 = vmatpush.msra.mxu0 0.0
    %136 = vmatpush.msra.mxu0 0.0
    %137 = vmatpush.msra.mxu0 0.0
    %138 = vmatpush.msra.mxu0 0.0
    %139 = vmatpush.msra.mxu0 0.0
    %140 = vmatpush.msra.mxu0 0.0
    %141 = vmatpush.msra.mxu0 %v121
    %142 = vmatpush.msra.mxu0 %v120
    %143 = vmatpush.msra.mxu0 %v119
    %144 = vmatpush.msra.mxu0 %v118
    %145 = vmatmul.f32.gmra.mxu0 %v127
    %v146 = vpop.f32.mrf.mxu0
    %v147 = vadd.f32 %v124, %v146
    %148 = vdwg.mxu0
    %149 = vmax.xlane.f32.xlu0 %v147
    %v150 = vpop.xlane.xlu0 %149
    %v151 = vsub.f32 %v147, %v150
    %v152 = vmul.f32 %v151, 1.442695
    %v153 = vpow.pop %v152
    %154 = vadd.xlane.f32.xlu0 %v153
    %v155 = vpop.xlane.xlu0 %154
    %v156 = vlog2.pop %v155
    %v157 = vmul.f32 %v156, 0.6931472
    %v158 = vsub.f32 %v151, %v157
    %v159 = vlaneseq
    %v160 = vand.u32 %v159, 127
    %vm161 = vcmp.eq.s32.totalorder %v160, 16
    %v162 = vsel %vm161, %v85, %v158
    %163 = vst [vmem:[#allocation9] sm:$0xff] %v162
    // Predicated region
    $region42: #{tpu_custom_call.1} parent=1 // pred_check
      _
    $region43: #{tpu_custom_call.1} parent=1 // pred_check_branch
      %165 = sbr.rel (0) target = $region45
    $region44: #{tpu_custom_call.1} parent=1 // pred_region
      %167 = vsyncadd [#allocation5], 0
      %s169 = sshll.u32 [#allocation9], 4
      %s170 = int_to_ptr.vmem [resolvable:$true] %s169
      %s171 = sshll.u32 %s7, 4
      %s172 = int_to_ptr.hbm [resolvable:$true] %s171
      %174 = dma.vmem_to_hbm [thread:$0]  %s170, 128, %s172, [#allocation5]
    $region45: #{tpu_custom_call.1} parent=1 // pred_fallthru
      _
    // Predicated region
    $region46: #{tpu_custom_call.1} parent=1 // pred_check
      _
    $region47: #{tpu_custom_call.1} parent=1 // pred_check_branch
      %176 = sbr.rel (0) target = $region49
    $region48: #{tpu_custom_call.1} parent=1 // pred_region
      %178 = dma.done [#allocation5], 128
    $region49: #{tpu_custom_call.1} parent=1 // pred_fallthru
      _
    %179 = vsyncpa [#allocation4], 1
    %180 = vsyncpa [#allocation7], 1
    %181 = vsyncpa [#allocation5], 1

</llo_original>
